<compile_context>
chip_gen: v6e
topology: v6e:2x2x1
jax: 0.10.0
libtpu: 0.0.40
codegen_flags: <defaults>
</compile_context>

<pallas_src>
import math

import jax
import jax.numpy as jnp
from jax.experimental import pallas as pl
from jax.experimental.pallas import tpu as pltpu


# ----------------------------------------------------------------------------
# Kernel body: pure tile move (vld -> vst stream).
# ----------------------------------------------------------------------------
def _copy_kernel(x_ref, o_ref):
    o_ref[...] = x_ref[...]


# ----------------------------------------------------------------------------
# Shape / tiling helpers.
# ----------------------------------------------------------------------------
def _lane_dense_2d(shape):
    """Fold an N-D shape into (rows, cols) with cols a multiple of 128 if possible."""
    total = math.prod(shape)
    # Try folding trailing dims until the fold is lane-dense.
    cols = 1
    for d in reversed(shape):
        cols *= d
        if cols % 128 == 0:
            return total // cols, cols
    # Fallback (review fix): full row-major flatten with a lane-dense last dim.
    if total % 128 == 0:
        cols = 128
        c = 128
        # Largest power-of-two multiple of 128 that divides total (capped).
        while c * 2 <= min(total, 1 << 17):
            c *= 2
            if total % c == 0:
                cols = c
        return total // cols, cols
    # Not lane-dense at all: single full-array row (full-extent block is legal).
    return 1, total


def _sublane_min(dtype) -> int:
    """Minimum native sublane multiple for this dtype (packed sub-32-bit dtypes)."""
    bits = jnp.dtype(dtype).itemsize * 8
    return max(8, 256 // bits)  # 8 for 32-bit, 16 for 16-bit, 32 for 8-bit


def _choose_tiles(rows, cols, itemsize, sub_min, budget_bytes=4 * 1024 * 1024):
    """Pick (tr, tc). Prefer full-width (tc == cols) contiguous blocks."""
    bytes_per_row = max(1, cols * itemsize)
    max_tr = max(1, budget_bytes // bytes_per_row)

    if rows <= max_tr:
        # Whole array fits in one block budget? Still tile rows a bit so the
        # grid can shard across TCs when rows allow it; otherwise full extent.
        pass

    # Largest multiple of sub_min that divides rows and fits the budget.
    tr = 0
    t = min(rows, max_tr)
    t -= t % sub_min
    while t >= sub_min:
        if rows % t == 0:
            tr = t
            break
        t -= sub_min
    if tr:
        return tr, cols
    if rows <= max_tr:
        # Full row extent (always a legal block shape) fits the budget.
        return rows, cols
    # Rare fallback: a single minimum-height full-width block exceeds the
    # budget -> split the column axis into lane-dense chunks.
    tc = 128
    c = 128
    while c * 2 <= cols and cols % (c * 2) == 0 and sub_min * c * 2 * itemsize <= budget_bytes:
        c *= 2
        tc = c
    tr = sub_min if rows % sub_min == 0 else rows
    return tr, tc


# ----------------------------------------------------------------------------
# Pallas identity-copy path (only used when a kernel artifact is required).
# ----------------------------------------------------------------------------
def _analysis_copy_kernel(x: jax.Array) -> jax.Array:
    orig_shape = x.shape
    rows, cols = _lane_dense_2d(orig_shape)
    x2d = x.reshape(rows, cols)

    itemsize = jnp.dtype(x.dtype).itemsize
    sub_min = _sublane_min(x.dtype)
    tr, tc = _choose_tiles(rows, cols, itemsize, sub_min)

    total_bytes = rows * cols * itemsize
    cost = pl.CostEstimate(flops=0, transcendentals=0, bytes_accessed=2 * total_bytes)

    if tc == cols:
        # Preferred path: full-width contiguous blocks, 1-D row grid.
        grid = (rows // tr,)
        in_spec = pl.BlockSpec((tr, cols), lambda i: (i, 0))
        out_spec = pl.BlockSpec((tr, cols), lambda i: (i, 0))
        dim_sem = ("parallel",)
    else:
        grid = (rows // tr, cols // tc)
        in_spec = pl.BlockSpec((tr, tc), lambda i, j: (i, j))
        out_spec = pl.BlockSpec((tr, tc), lambda i, j: (i, j))
        dim_sem = ("parallel", "parallel")

    out2d = pl.pallas_call(
        _copy_kernel,
        out_shape=jax.ShapeDtypeStruct((rows, cols), x.dtype),
        grid=grid,
        in_specs=[in_spec],
        out_specs=out_spec,
        cost_estimate=cost,
        compiler_params=pltpu.CompilerParams(dimension_semantics=dim_sem),
    )(x2d)

    return out2d.reshape(orig_shape)


# ----------------------------------------------------------------------------
# Public forward.
# ----------------------------------------------------------------------------
def analysis_forward(x: jax.Array, *, force_kernel: bool = False) -> jax.Array:
    """Forward pass of the (abstract) Analysis module.

    The reference forward() is a no-op, so by default this returns `x`
    unchanged with no kernel launch and no HBM traffic (the dominant
    optimization).  Pass force_kernel=True to run the identity Pallas copy
    kernel if a kernel artifact is required.
    """
    if not force_kernel:
        return x
    return _analysis_copy_kernel(x)


if __name__ == "__main__":
    key = jax.random.PRNGKey(0)
    # Small NCHW input consistent with a conv-style analysis module.
    x = jax.random.normal(key, (2, 4, 16, 16), dtype=jnp.float32)
    x_expected = jax.device_get(x)

    # Default (optimal) path: pure pass-through, no kernel launch.
    y_fast = analysis_forward(x)
    jax.block_until_ready(y_fast)
    assert y_fast.shape == x.shape and y_fast.dtype == x.dtype
    assert bool(jnp.allclose(y_fast, jnp.asarray(x_expected)))

    # Kernel path: exercise the Pallas identity copy once.
    y = analysis_forward(x, force_kernel=True)
    jax.block_until_ready(y)
    assert y.shape == x.shape and y.dtype == x.dtype
    assert bool(jnp.allclose(y, jnp.asarray(x_expected)))

    print("KERNEL_OK")
</pallas_src>

<mosaic_0001>
module attributes {stable_mosaic.version = 11 : i64} {
  func.func @_copy_kernel(%arg0: i32, %arg1: memref<8x256xf32, #tpu.memory_space<vmem>>, %arg2: memref<8x256xf32, #tpu.memory_space<vmem>>) attributes {dimension_semantics = [#tpu.dimension_semantics<parallel>], iteration_bounds = array<i64: 1>, scalar_prefetch = 0 : i64, scratch_operands = 0 : i64, tpu.core_type = #tpu.core_type<tc>, window_params = [{transform_indices = @transform_0, window_bounds = array<i64: 8, 256>}, {transform_indices = @transform_1, window_bounds = array<i64: 8, 256>}]} {
    %c0 = arith.constant 0 : index
    %c0_0 = arith.constant 0 : index
    %0 = vector.load %arg1[%c0, %c0_0] : memref<8x256xf32, #tpu.memory_space<vmem>>, vector<8x256xf32>
    %c0_1 = arith.constant 0 : index
    %c0_2 = arith.constant 0 : index
    %1 = vector.load %arg2[%c0_1, %c0_2] : memref<8x256xf32, #tpu.memory_space<vmem>>, vector<8x256xf32>
    tpu.vector_store %arg2[%c0_1, %c0_2], %0 {strides = array<i32>} : memref<8x256xf32, #tpu.memory_space<vmem>>, vector<8x256xf32>,
    return
  }
  func.func @transform_0(%arg0: i32) -> (i32, i32) {
    %c0_i32 = arith.constant 0 : i32
    %c0_i32_0 = arith.constant 0 : i32
    return %arg0, %c0_i32 : i32, i32
  }
  func.func @transform_1(%arg0: i32) -> (i32, i32) {
    %c0_i32 = arith.constant 0 : i32
    %c0_i32_0 = arith.constant 0 : i32
    return %arg0, %c0_i32 : i32, i32
  }
}

</mosaic_0001>

<llo_original>
// kernel: tpu_custom_call.1
$region0: #{tpu_custom_call.1}
  #allocation0 [shape = 'u32[]', space=smem, size = 0x4, offset = 0x4, fixed_abs, tag = 'smem constant byte address 0x4 - core index']
  #allocation1 [shape = 'u32[144,128]{1,0:T(1,128)}', space=vmem, size = 0x12000, scoped, tag = 'internal scratch']
  %s0 = inlined_call_operand.hbm [shape: f32[8,256], index: 0, kind: input, shape index: {}]
  %s1 = inlined_call_operand.hbm [shape: f32[8,256], index: 1, kind: output, shape index: {}]
  %s2 = sld [smem:[#allocation0]]
  $region18: #{tpu_custom_call.1} parent=0
    _
  %s4 = ssub.s32 1, %s2
  %s5 = scalar_select 0, %s4, %s2
  $region1: #{tpu_custom_call.1} parent=0
    #allocation2 [shape = 'u8[8192]{0}', space=vmem, size = 0x2000, scoped, tag = 'input window, operand 0, single buffered']
    #allocation3 [shape = 's32[1]{0}', space=sflag, size = 0x4, scoped, tag = 'scoped memory for tpu_custom_call.1']
    #allocation4 [shape = 's32[1]{0}', space=sflag, size = 0x4, scoped, tag = 'scoped memory for tpu_custom_call.1']
    #allocation5 [shape = 'u8[8192]{0}', space=vmem, size = 0x2000, scoped, tag = 'output window, operand 0, single buffered']
    %6 = vsyncpa [#allocation3], 0
    %7 = vsyncpa [#allocation4], 0
    // Predicated region
    $region2: #{tpu_custom_call.1} parent=1 // pred_check
      _
    $region3: #{tpu_custom_call.1} parent=1 // pred_check_branch
      %9 = sbr.rel (0) target = $region5
    $region4: #{tpu_custom_call.1} parent=1 // pred_region
      %s11 = ssub.s32 256, 256
      %12 = vsyncadd [#allocation3], %s11
      %s14 = sshll.u32 [#allocation2], 4
      %s15 = int_to_ptr.vmem [resolvable:$true] %s14
      %17 = dma.hbm_to_vmem [thread:$0]  %s0, 256, %s15, [#allocation3]
    $region5: #{tpu_custom_call.1} parent=1 // pred_fallthru
      _
    // Predicated region
    $region6: #{tpu_custom_call.1} parent=1 // pred_check
      _
    $region7: #{tpu_custom_call.1} parent=1 // pred_check_branch
      %19 = sbr.rel (0) target = $region9
    $region8: #{tpu_custom_call.1} parent=1 // pred_region
      %20 = dma.done [#allocation3], 256
    $region9: #{tpu_custom_call.1} parent=1 // pred_fallthru
      _
    %v21 = vld [vmem:[#allocation2] sm:$0xff]
    %v22 = vld [vmem:[#allocation2 + $0x8] sm:$0xff]
    %23 = vst [vmem:[#allocation5] sm:$0xff] %v21
    %24 = vst [vmem:[#allocation5 + $0x8] sm:$0xff] %v22
    // Predicated region
    $region10: #{tpu_custom_call.1} parent=1 // pred_check
      _
    $region11: #{tpu_custom_call.1} parent=1 // pred_check_branch
      %26 = sbr.rel (0) target = $region13
    $region12: #{tpu_custom_call.1} parent=1 // pred_region
      %s28 = ssub.s32 256, 256
      %29 = vsyncadd [#allocation4], %s28
      %s31 = sshll.u32 [#allocation5], 4
      %s32 = int_to_ptr.vmem [resolvable:$true] %s31
      %34 = dma.vmem_to_hbm [thread:$0]  %s32, 256, %s1, [#allocation4]
    $region13: #{tpu_custom_call.1} parent=1 // pred_fallthru
      _
    // Predicated region
    $region14: #{tpu_custom_call.1} parent=1 // pred_check
      _
    $region15: #{tpu_custom_call.1} parent=1 // pred_check_branch
      %36 = sbr.rel (0) target = $region17
    $region16: #{tpu_custom_call.1} parent=1 // pred_region
      %37 = dma.done [#allocation4], 256
    $region17: #{tpu_custom_call.1} parent=1 // pred_fallthru
      _
    %38 = vsyncpa [#allocation3], 1
    %39 = vsyncpa [#allocation4], 1

</llo_original>
